<compile_context>
chip_gen: v7x
topology: tpu7x:2x2x1
jax: 0.10.0
libtpu: 0.0.40
codegen_flags: <defaults>
</compile_context>

<pallas_src>
import jax
import jax.numpy as jnp
from jax.experimental import pallas as pl
from jax.experimental.pallas import tpu as pltpu

HIDDEN = 256          # fixed by the module definition
LANE = 128            # TPU lane width
NEG_BIG = -1e30       # "minus infinity" for padded softmax lanes (f32-safe)
TILE_B_MAX = 512      # per-step row tile cap (multiple of 128; MXU/HBM friendly)


def _round_up(x, m):
    return (x + m - 1) // m * m


def _choose_tile_b(b):
    """Row tile: multiple of 16 (bf16 sublane packing).

    Small batches get a single minimal tile; large batches get big tiles to amortize
    per-grid-step overhead, but capped at ~ceil(b/2) so there are >= 2 grid steps
    (lets the "parallel" batch axis shard across both v7x TensorCores).
    """
    b16 = _round_up(b, 16)
    if b16 <= 256:
        return b16
    return min(TILE_B_MAX, _round_up((b16 + 1) // 2, 16))


def _actor_kernel(x_ref, w1_ref, b1_ref, w2_ref, b2_ref, o_ref):
    # x:  (tile_b, obs)       f32  (cast to bf16 here; hides under the activation DMA)
    # w1: (obs, 256)          bf16   b1: (1, 256)      f32
    # w2: (256, act_pad)      bf16   b2: (1, act_pad)  f32 (padded lanes = NEG_BIG)
    # o:  (tile_b, act_dims)  f32    -- compact row softmax
    x = x_ref[...].astype(jnp.bfloat16)

    # Linear 1 (+bias), f32 accumulate; tanh in f32 (v5e VPU/EUP have no bf16 path).
    h = jnp.dot(x, w1_ref[...], preferred_element_type=jnp.float32) + b1_ref[...]
    h = jnp.tanh(h)

    # Linear 2: bf16 into the MXU, f32 accumulate, padded bias
    # (padded lanes get NEG_BIG -> exp underflows to exactly 0).
    logits = jnp.dot(h.astype(jnp.bfloat16), w2_ref[...],
                     preferred_element_type=jnp.float32) + b2_ref[...]

    # Row softmax over the lane-dense padded axis; approx reciprocal uses the EUP slot.
    # (Rows sum to 1 within ~1e-4; renormalize downstream if exact sums are required.)
    m = jnp.max(logits, axis=-1, keepdims=True)
    e = jnp.exp(logits - m)
    denom = jnp.sum(e, axis=-1, keepdims=True)
    probs = e * pl.reciprocal(denom, approx=True)

    # Store only the real action lanes (masked vst; 16x less HBM output traffic).
    act_dims = o_ref.shape[-1]
    o_ref[...] = probs[:, :act_dims].astype(o_ref.dtype)


def prepare_actor_params(w1, b1, w2, b2):
    """Convert f32 (in_features, out_features) weights to the padded kernel layout."""
    obs_dims, hidden = w1.shape
    assert hidden == HIDDEN
    act_dims = w2.shape[1]
    act_pad = _round_up(act_dims, LANE)

    w2p = jnp.zeros((HIDDEN, act_pad), jnp.float32).at[:, :act_dims].set(w2)
    b2p = jnp.full((1, act_pad), NEG_BIG, jnp.float32).at[0, :act_dims].set(b2)
    return dict(
        w1=w1.astype(jnp.bfloat16),
        b1=b1.reshape(1, HIDDEN).astype(jnp.float32),
        w2=w2p.astype(jnp.bfloat16),
        b2=b2p,
        act_dims=act_dims,
    )


def actor_forward(s, params):
    """s: (obs_dims,) or (B, obs_dims) -> softmax probabilities (act_dims,) / (B, act_dims)."""
    w1, b1, w2, b2 = params["w1"], params["b1"], params["w2"], params["b2"]
    act_dims = params["act_dims"]
    obs_dims = w1.shape[0]
    act_pad = w2.shape[1]

    squeeze = (s.ndim == 1)
    x = s.reshape(1, obs_dims) if squeeze else s
    x = x.astype(jnp.float32)          # bf16 cast happens inside the kernel
    b = x.shape[0]

    tile_b = _choose_tile_b(b)
    b_pad = _round_up(b, tile_b)
    if b_pad != b:
        x = jnp.pad(x, ((0, b_pad - b), (0, 0)))

    grid = (b_pad // tile_b,)

    cost = pl.CostEstimate(
        flops=2 * b_pad * (obs_dims * HIDDEN + HIDDEN * act_pad),
        transcendentals=b_pad * (HIDDEN + act_pad),          # tanh + exp
        bytes_accessed=(b_pad * obs_dims * 4                  # x (f32)
                        + obs_dims * HIDDEN * 2 + HIDDEN * 4  # w1, b1
                        + HIDDEN * act_pad * 2 + act_pad * 4  # w2, b2
                        + b_pad * act_dims * 4),              # compact output
    )

    out = pl.pallas_call(
        _actor_kernel,
        out_shape=jax.ShapeDtypeStruct((b_pad, act_dims), jnp.float32),
        grid=grid,
        in_specs=[
            # activations: a new row tile each grid step
            pl.BlockSpec((tile_b, obs_dims), lambda i: (i, 0)),
            # weights / biases: constant block index -> VMEM-resident, no re-DMA
            pl.BlockSpec((obs_dims, HIDDEN), lambda i: (0, 0)),
            pl.BlockSpec((1, HIDDEN), lambda i: (0, 0)),
            pl.BlockSpec((HIDDEN, act_pad), lambda i: (0, 0)),
            pl.BlockSpec((1, act_pad), lambda i: (0, 0)),
        ],
        # compact output block: last dim equals the full array dim (legal, lane-masked store)
        out_specs=pl.BlockSpec((tile_b, act_dims), lambda i: (i, 0)),
        compiler_params=pltpu.CompilerParams(
            dimension_semantics=("parallel",)),  # shard batch tiles across TCs (v7x)
        cost_estimate=cost,
    )(x, w1, b1, w2, b2)

    probs = out[:b] if b_pad != b else out
    return probs.reshape(act_dims) if squeeze else probs


if __name__ == "__main__":
    obs_dims, act_dims = 32, 8
    batch = 512  # large enough to exercise the 2-step "parallel" grid path

    key = jax.random.PRNGKey(0)
    k1, k2, k3, k4, k5 = jax.random.split(key, 5)
    # torch.nn.Linear-style init: U(-1/sqrt(fan_in), 1/sqrt(fan_in)), weights as (in, out)
    bound1 = 1.0 / jnp.sqrt(obs_dims)
    bound2 = 1.0 / jnp.sqrt(HIDDEN)
    w1 = jax.random.uniform(k1, (obs_dims, HIDDEN), jnp.float32, -bound1, bound1)
    b1 = jax.random.uniform(k2, (HIDDEN,), jnp.float32, -bound1, bound1)
    w2 = jax.random.uniform(k3, (HIDDEN, act_dims), jnp.float32, -bound2, bound2)
    b2 = jax.random.uniform(k4, (act_dims,), jnp.float32, -bound2, bound2)
    params = prepare_actor_params(w1, b1, w2, b2)

    xs = jax.random.normal(k5, (batch, obs_dims), jnp.float32)

    # Plain-JAX reference with the same bf16 rounding of matmul inputs.
    def ref(x):
        xb = x.astype(jnp.bfloat16).astype(jnp.float32)
        w1f = w1.astype(jnp.bfloat16).astype(jnp.float32)
        w2f = w2.astype(jnp.bfloat16).astype(jnp.float32)
        h = jnp.tanh(xb @ w1f + b1)
        hb = h.astype(jnp.bfloat16).astype(jnp.float32)
        return jax.nn.softmax(hb @ w2f + b2, axis=-1)

    # Batched kernel forward (2 grid steps of 256 rows).
    probs = jax.block_until_ready(actor_forward(xs, params))
    probs_ref = ref(xs)
    assert probs.shape == (batch, act_dims)
    assert bool(jnp.all(jnp.abs(jnp.sum(probs, axis=-1) - 1.0) < 1e-3))
    assert float(jnp.max(jnp.abs(probs - probs_ref))) < 5e-3, "batched mismatch vs reference"

    # Odd small batch (exercises batch padding path).
    xs_small = xs[:13]
    p_small = jax.block_until_ready(actor_forward(xs_small, params))
    assert p_small.shape == (13, act_dims)
    assert float(jnp.max(jnp.abs(p_small - probs_ref[:13]))) < 5e-3, "small-batch mismatch"

    # Single-observation path: matches the original module's forward(s) with Softmax(dim=0).
    s = xs[0]
    p1 = jax.block_until_ready(actor_forward(s, params))
    assert p1.shape == (act_dims,)
    assert float(jnp.max(jnp.abs(p1 - probs_ref[0]))) < 5e-3, "single-sample mismatch vs reference"

    print("KERNEL_OK")
</pallas_src>

<mosaic_0001>
module attributes {stable_mosaic.version = 11 : i64} {
  func.func @_actor_kernel(%arg0: i32, %arg1: memref<256x32xf32, #tpu.memory_space<vmem>>, %arg2: memref<32x256xbf16, #tpu.memory_space<vmem>>, %arg3: memref<1x256xf32, #tpu.memory_space<vmem>>, %arg4: memref<256x128xbf16, #tpu.memory_space<vmem>>, %arg5: memref<1x128xf32, #tpu.memory_space<vmem>>, %arg6: memref<256x8xf32, #tpu.memory_space<vmem>>) attributes {dimension_semantics = [#tpu.dimension_semantics<parallel>], iteration_bounds = array<i64: 2>, scalar_prefetch = 0 : i64, scratch_operands = 0 : i64, tpu.core_type = #tpu.core_type<tc>, window_params = [{transform_indices = @transform_0, window_bounds = array<i64: 256, 32>}, {pipeline_mode = #tpu.pipeline_mode<synchronous>, transform_indices = @transform_1, window_bounds = array<i64: 32, 256>}, {pipeline_mode = #tpu.pipeline_mode<synchronous>, transform_indices = @transform_2, window_bounds = array<i64: 1, 256>}, {pipeline_mode = #tpu.pipeline_mode<synchronous>, transform_indices = @transform_3, window_bounds = array<i64: 256, 128>}, {pipeline_mode = #tpu.pipeline_mode<synchronous>, transform_indices = @transform_4, window_bounds = array<i64: 1, 128>}, {transform_indices = @transform_5, window_bounds = array<i64: 256, 8>}]} {
    %c0 = arith.constant 0 : index
    %c0_0 = arith.constant 0 : index
    %0 = vector.load %arg1[%c0, %c0_0] : memref<256x32xf32, #tpu.memory_space<vmem>>, vector<256x32xf32>
    %1 = arith.truncf %0 : vector<256x32xf32> to vector<256x32xbf16>
    %c0_1 = arith.constant 0 : index
    %c0_2 = arith.constant 0 : index
    %2 = vector.load %arg2[%c0_1, %c0_2] : memref<32x256xbf16, #tpu.memory_space<vmem>>, vector<32x256xbf16>
    %cst = arith.constant dense<0.000000e+00> : vector<256x256xf32>
    %3 = tpu.matmul %1, %2, %cst {dimension_numbers = #tpu.dot_dimension_numbers<[1], [0], [0], [1], [0, 0, 1, 1], [], []>} : vector<256x32xbf16>, vector<32x256xbf16>, vector<256x256xf32> -> vector<256x256xf32>
    %c0_3 = arith.constant 0 : index
    %c0_4 = arith.constant 0 : index
    %4 = vector.load %arg3[%c0_3, %c0_4] : memref<1x256xf32, #tpu.memory_space<vmem>>, vector<1x256xf32>
    %5 = vector.broadcast %4 : vector<1x256xf32> to vector<256x256xf32>
    %6 = arith.addf %3, %5 : vector<256x256xf32>
    %7 = math.tanh %6 : vector<256x256xf32>
    %8 = arith.truncf %7 : vector<256x256xf32> to vector<256x256xbf16>
    %c0_5 = arith.constant 0 : index
    %c0_6 = arith.constant 0 : index
    %9 = vector.load %arg4[%c0_5, %c0_6] : memref<256x128xbf16, #tpu.memory_space<vmem>>, vector<256x128xbf16>
    %cst_7 = arith.constant dense<0.000000e+00> : vector<256x128xf32>
    %10 = tpu.matmul %8, %9, %cst_7 {dimension_numbers = #tpu.dot_dimension_numbers<[1], [0], [0], [1], [0, 0, 1, 1], [], []>} : vector<256x256xbf16>, vector<256x128xbf16>, vector<256x128xf32> -> vector<256x128xf32>
    %c0_8 = arith.constant 0 : index
    %c0_9 = arith.constant 0 : index
    %11 = vector.load %arg5[%c0_8, %c0_9] : memref<1x128xf32, #tpu.memory_space<vmem>>, vector<1x128xf32>
    %12 = vector.broadcast %11 : vector<1x128xf32> to vector<256x128xf32>
    %13 = arith.addf %10, %12 : vector<256x128xf32>
    %cst_10 = arith.constant dense<0xFF800000> : vector<256xf32>
    %14 = vector.multi_reduction <maximumf>, %13, %cst_10 [1] : vector<256x128xf32> to vector<256xf32>
    %15 = vector.shape_cast %14 : vector<256xf32> to vector<256x1xf32>
    %16 = vector.broadcast %15 : vector<256x1xf32> to vector<256x128xf32>
    %17 = arith.subf %13, %16 : vector<256x128xf32>
    %18 = math.exp %17 : vector<256x128xf32>
    %cst_11 = arith.constant dense<0.000000e+00> : vector<256xf32>
    %19 = vector.multi_reduction <add>, %18, %cst_11 [1] : vector<256x128xf32> to vector<256xf32>
    %20 = vector.shape_cast %19 : vector<256xf32> to vector<256x1xf32>
    %21 = tpu.reciprocal %20 {approx = true} : vector<256x1xf32> -> vector<256x1xf32>
    %22 = vector.broadcast %21 : vector<256x1xf32> to vector<256x128xf32>
    %23 = arith.mulf %18, %22 : vector<256x128xf32>
    %24 = vector.extract_strided_slice %23 {offsets = [0, 0], sizes = [256, 8], strides = [1, 1]} : vector<256x128xf32> to vector<256x8xf32>
    %c0_12 = arith.constant 0 : index
    %c0_13 = arith.constant 0 : index
    %25 = vector.load %arg6[%c0_12, %c0_13] : memref<256x8xf32, #tpu.memory_space<vmem>>, vector<256x8xf32>
    tpu.vector_store %arg6[%c0_12, %c0_13], %24 {strides = array<i32>} : memref<256x8xf32, #tpu.memory_space<vmem>>, vector<256x8xf32>,
    return
  }
  func.func @transform_0(%arg0: i32) -> (i32, i32) {
    %c0_i32 = arith.constant 0 : i32
    %c0_i32_0 = arith.constant 0 : i32
    return %arg0, %c0_i32 : i32, i32
  }
  func.func @transform_1(%arg0: i32) -> (i32, i32) {
    %c0_i32 = arith.constant 0 : i32
    %c0_i32_0 = arith.constant 0 : i32
    %c0_i32_1 = arith.constant 0 : i32
    return %c0_i32, %c0_i32_0 : i32, i32
  }
  func.func @transform_2(%arg0: i32) -> (i32, i32) {
    %c0_i32 = arith.constant 0 : i32
    %c0_i32_0 = arith.constant 0 : i32
    %c0_i32_1 = arith.constant 0 : i32
    return %c0_i32, %c0_i32_0 : i32, i32
  }
  func.func @transform_3(%arg0: i32) -> (i32, i32) {
    %c0_i32 = arith.constant 0 : i32
    %c0_i32_0 = arith.constant 0 : i32
    %c0_i32_1 = arith.constant 0 : i32
    return %c0_i32, %c0_i32_0 : i32, i32
  }
  func.func @transform_4(%arg0: i32) -> (i32, i32) {
    %c0_i32 = arith.constant 0 : i32
    %c0_i32_0 = arith.constant 0 : i32
    %c0_i32_1 = arith.constant 0 : i32
    return %c0_i32, %c0_i32_0 : i32, i32
  }
  func.func @transform_5(%arg0: i32) -> (i32, i32) {
    %c0_i32 = arith.constant 0 : i32
    %c0_i32_0 = arith.constant 0 : i32
    return %arg0, %c0_i32 : i32, i32
  }
}

</mosaic_0001>

<llo_original>
// kernel: tpu_custom_call.1
$region0: #{tpu_custom_call.1}
  #allocation0 [shape = 'u32[]', space=smem, size = 0x4, offset = 0x4, fixed_abs, tag = 'smem constant byte address 0x4 - core index']
  #allocation1 [shape = 'u32[144,128]{1,0:T(1,128)}', space=vmem, size = 0x12000, scoped, tag = 'internal scratch']
  %s0 = inlined_call_operand.vmem [shape: f32[512,32], index: 0, kind: input, shape index: {}]
  %s1 = inlined_call_operand.vmem [shape: bf16[32,256], index: 1, kind: input, shape index: {}]
  %s2 = inlined_call_operand.vmem [shape: f32[1,256], index: 2, kind: input, shape index: {}]
  %s3 = inlined_call_operand.vmem [shape: bf16[256,128], index: 3, kind: input, shape index: {}]
  %s4 = inlined_call_operand.vmem [shape: f32[1,128], index: 4, kind: input, shape index: {}]
  %s5 = inlined_call_operand.vmem [shape: f32[512,8], index: 5, kind: output, shape index: {}]
  %s6 = sld [smem:[#allocation0]]
  $region53: #{tpu_custom_call.1} parent=0
    _
  %s8 = ssub.s32 1, %s6
  %s9 = scalar_select 0, %s8, %s6
  loop: start=0, step=1, limit=4
  $region2: #{tpu_custom_call.1} parent=0 // loop_pre_header
    _
  $region3: #{tpu_custom_call.1} parent=0 // loop_header
    %s11 = sphi 0, %s15
    %p12 = scmp.ge.s32.totalorder %s11, 4
    %s21 = sphi 0, %s23
    %s24 = sphi 0, %s21
    %s25 = sphi 0, %s24
    %s41 = sphi 0, %s25
    %s45 = sphi 0, %s45
    %s47 = sphi 0, %s45
    %s48 = sphi 0, %s47
    %s62 = sphi 0, %s48
    %s66 = sphi 0, %s66
    %s68 = sphi 0, %s66
    %s69 = sphi 0, %s68
    %s83 = sphi 0, %s69
    %s87 = sphi 0, %s87
    %s89 = sphi 0, %s87
    %s90 = sphi 0, %s89
    %s104 = sphi 0, %s90
    %s108 = sphi 0, %s108
    %s110 = sphi 0, %s108
    %s111 = sphi 0, %s110
    %s125 = sphi 0, %s111
    %s131 = sphi 0, %s133
    %s134 = sphi 0, %s131
    %s135 = sphi 0, %s134
    %s151 = sphi 0, %s135
  $region4: #{tpu_custom_call.1} parent=0 // loop_header_branch
    %14 = sbr.rel (%p12) target = $region8
  $region5: #{tpu_custom_call.1} parent=0 // loop_body
    %s16 = ssub.s32 %s11, 1
    %s17 = ssub.s32 %s11, 2
    %s18 = sadd.s32 %s11, 1
    %s19 = ssub.s32 %s11, %s18
    %p20 = scmp.eq.s32.totalorder %s19, 0
    %s22 = sadd.s32 %s21, 1
    %s23 = scalar_select %p20, %s21, %s22
    %p26 = pneg %p20
    %p27 = scmp.eq.s32.totalorder %s11, 1
    %p28 = por %p26, %p27
    %p29 = scmp.ne.s32.totalorder %s21, %s24
    %p30 = scmp.eq.s32.totalorder %s11, 0
    %p31 = por %p29, %p30
    %p32 = scmp.ne.s32.totalorder %s21, %s24
    %p33 = scmp.eq.s32.totalorder %s16, 1
    %p34 = por %p32, %p33
    %p35 = scmp.ne.s32.totalorder %s24, %s25
    %p36 = scmp.eq.s32.totalorder %s16, 0
    %p37 = por %p35, %p36
    %p38 = scmp.ne.s32.totalorder %s24, %s25
    %p39 = scmp.eq.s32.totalorder %s17, 1
    %p40 = por %p38, %p39
    %p42 = scmp.ne.s32.totalorder %s25, %s41
    %p43 = scmp.eq.s32.totalorder %s17, 0
    %p44 = por %p42, %p43
    %s46 = sadd.s32 %s45, 1
    %p49 = scmp.eq.s32.totalorder %s11, 1
    %p50 = scmp.ne.s32.totalorder %s45, %s47
    %p51 = scmp.eq.s32.totalorder %s11, 0
    %p52 = por %p50, %p51
    %p53 = scmp.ne.s32.totalorder %s45, %s47
    %p54 = scmp.eq.s32.totalorder %s16, 1
    %p55 = por %p53, %p54
    %p56 = scmp.ne.s32.totalorder %s47, %s48
    %p57 = scmp.eq.s32.totalorder %s16, 0
    %p58 = por %p56, %p57
    %p59 = scmp.ne.s32.totalorder %s47, %s48
    %p60 = scmp.eq.s32.totalorder %s17, 1
    %p61 = por %p59, %p60
    %p63 = scmp.ne.s32.totalorder %s48, %s62
    %p64 = scmp.eq.s32.totalorder %s17, 0
    %p65 = por %p63, %p64
    %s67 = sadd.s32 %s66, 1
    %p70 = scmp.eq.s32.totalorder %s11, 1
    %p71 = scmp.ne.s32.totalorder %s66, %s68
    %p72 = scmp.eq.s32.totalorder %s11, 0
    %p73 = por %p71, %p72
    %p74 = scmp.ne.s32.totalorder %s66, %s68
    %p75 = scmp.eq.s32.totalorder %s16, 1
    %p76 = por %p74, %p75
    %p77 = scmp.ne.s32.totalorder %s68, %s69
    %p78 = scmp.eq.s32.totalorder %s16, 0
    %p79 = por %p77, %p78
    %p80 = scmp.ne.s32.totalorder %s68, %s69
    %p81 = scmp.eq.s32.totalorder %s17, 1
    %p82 = por %p80, %p81
    %p84 = scmp.ne.s32.totalorder %s69, %s83
    %p85 = scmp.eq.s32.totalorder %s17, 0
    %p86 = por %p84, %p85
    %s88 = sadd.s32 %s87, 1
    %p91 = scmp.eq.s32.totalorder %s11, 1
    %p92 = scmp.ne.s32.totalorder %s87, %s89
    %p93 = scmp.eq.s32.totalorder %s11, 0
    %p94 = por %p92, %p93
    %p95 = scmp.ne.s32.totalorder %s87, %s89
    %p96 = scmp.eq.s32.totalorder %s16, 1
    %p97 = por %p95, %p96
    %p98 = scmp.ne.s32.totalorder %s89, %s90
    %p99 = scmp.eq.s32.totalorder %s16, 0
    %p100 = por %p98, %p99
    %p101 = scmp.ne.s32.totalorder %s89, %s90
    %p102 = scmp.eq.s32.totalorder %s17, 1
    %p103 = por %p101, %p102
    %p105 = scmp.ne.s32.totalorder %s90, %s104
    %p106 = scmp.eq.s32.totalorder %s17, 0
    %p107 = por %p105, %p106
    %s109 = sadd.s32 %s108, 1
    %p112 = scmp.eq.s32.totalorder %s11, 1
    %p113 = scmp.ne.s32.totalorder %s108, %s110
    %p114 = scmp.eq.s32.totalorder %s11, 0
    %p115 = por %p113, %p114
    %p116 = scmp.ne.s32.totalorder %s108, %s110
    %p117 = scmp.eq.s32.totalorder %s16, 1
    %p118 = por %p116, %p117
    %p119 = scmp.ne.s32.totalorder %s110, %s111
    %p120 = scmp.eq.s32.totalorder %s16, 0
    %p121 = por %p119, %p120
    %p122 = scmp.ne.s32.totalorder %s110, %s111
    %p123 = scmp.eq.s32.totalorder %s17, 1
    %p124 = por %p122, %p123
    %p126 = scmp.ne.s32.totalorder %s111, %s125
    %p127 = scmp.eq.s32.totalorder %s17, 0
    %p128 = por %p126, %p127
    %s129 = ssub.s32 %s11, %s18
    %p130 = scmp.eq.s32.totalorder %s129, 0
    %s132 = sadd.s32 %s131, 1
    %s133 = scalar_select %p130, %s131, %s132
    %p136 = pneg %p130
    %p137 = scmp.eq.s32.totalorder %s11, 1
    %p138 = por %p136, %p137
    %p139 = scmp.ne.s32.totalorder %s131, %s134
    %p140 = scmp.eq.s32.totalorder %s11, 0
    %p141 = por %p139, %p140
    %p142 = scmp.ne.s32.totalorder %s131, %s134
    %p143 = scmp.eq.s32.totalorder %s16, 1
    %p144 = por %p142, %p143
    %p145 = scmp.ne.s32.totalorder %s134, %s135
    %p146 = scmp.eq.s32.totalorder %s16, 0
    %p147 = por %p145, %p146
    %p148 = scmp.ne.s32.totalorder %s134, %s135
    %p149 = scmp.eq.s32.totalorder %s17, 1
    %p150 = por %p148, %p149
    %p152 = scmp.ne.s32.totalorder %s135, %s151
    %p153 = scmp.eq.s32.totalorder %s17, 0
    %p154 = por %p152, %p153
    %p155 = scmp.le.s32.totalorder 1, %s11
    %p156 = scmp.lt.s32.totalorder %s11, 3
    %p157 = pnand %p155, %p156
    %p158 = pneg %p157
    // Predicated region
    $region9: #{tpu_custom_call.1} parent=5 // pred_check
      _
    $region10: #{tpu_custom_call.1} parent=5 // pred_check_branch
      %160 = sbr.rel (%p157) target = $region12
    $region11: #{tpu_custom_call.1} parent=5 // pred_region
      %s161 = ssub.s32 %s11, 1
      // Predicated region
      $region13: #{tpu_custom_call.1} parent=11 // pred_check
        %p162 = pneg %p58
      $region14: #{tpu_custom_call.1} parent=11 // pred_check_branch
        %164 = sbr.rel (%p162) target = $region16
      $region15: #{tpu_custom_call.1} parent=11 // pred_region
        _
      $region16: #{tpu_custom_call.1} parent=11 // pred_fallthru
        _
      // Predicated region
      $region17: #{tpu_custom_call.1} parent=11 // pred_check
        %p165 = pneg %p79
      $region18: #{tpu_custom_call.1} parent=11 // pred_check_branch
        %167 = sbr.rel (%p165) target = $region20
      $region19: #{tpu_custom_call.1} parent=11 // pred_region
        _
      $region20: #{tpu_custom_call.1} parent=11 // pred_fallthru
        _
      // Predicated region
      $region21: #{tpu_custom_call.1} parent=11 // pred_check
        %p168 = pneg %p100
      $region22: #{tpu_custom_call.1} parent=11 // pred_check_branch
        %170 = sbr.rel (%p168) target = $region24
      $region23: #{tpu_custom_call.1} parent=11 // pred_region
        _
      $region24: #{tpu_custom_call.1} parent=11 // pred_fallthru
        _
      // Predicated region
      $region25: #{tpu_custom_call.1} parent=11 // pred_check
        %p171 = pneg %p121
      $region26: #{tpu_custom_call.1} parent=11 // pred_check_branch
        %173 = sbr.rel (%p171) target = $region28
      $region27: #{tpu_custom_call.1} parent=11 // pred_region
        _
      $region28: #{tpu_custom_call.1} parent=11 // pred_fallthru
        _
    $region12: #{tpu_custom_call.1} parent=5 // pred_fallthru
      _
    %p174 = scmp.lt.s32.totalorder %s11, 2
    // Predicated region
    $region29: #{tpu_custom_call.1} parent=5 // pred_check
      %p175 = pneg %p174
    $region30: #{tpu_custom_call.1} parent=5 // pred_check_branch
      %177 = sbr.rel (%p175) target = $region32
    $region31: #{tpu_custom_call.1} parent=5 // pred_region
      // Predicated region
      $region33: #{tpu_custom_call.1} parent=31 // pred_check
        %p178 = pneg %p31
      $region34: #{tpu_custom_call.1} parent=31 // pred_check_branch
        %180 = sbr.rel (%p178) target = $region36
      $region35: #{tpu_custom_call.1} parent=31 // pred_region
        %s181 = smul.u32 32, %s11
        %p182 = scmp.lt.s32.totalorder %s181, 63
        %s183 = scalar_select %p182, %s181, 63
        %s184 = smul.addr %s183, 8
        %s185 = scalar_lea.vmem %s0, %s184
        %s186 = smul.u32 32, %s11
      $region36: #{tpu_custom_call.1} parent=31 // pred_fallthru
        _
    $region32: #{tpu_custom_call.1} parent=5 // pred_fallthru
      _
    %p187 = scmp.le.s32.totalorder 1, %s11
    %p188 = scmp.lt.s32.totalorder %s11, 3
    %p189 = pnand %p187, %p188
    %p190 = pneg %p189
    // Predicated region
    $region37: #{tpu_custom_call.1} parent=5 // pred_check
      _
    $region38: #{tpu_custom_call.1} parent=5 // pred_check_branch
      %192 = sbr.rel (%p189) target = $region40
    $region39: #{tpu_custom_call.1} parent=5 // pred_region
      %s193 = ssub.s32 %s11, 1
      %s194 = smul.u32 32, %s16
      %p195 = scmp.lt.s32.totalorder %s194, 63
      %s196 = scalar_select %p195, %s194, 63
      %s197 = smul.addr %s196, 8
      %s198 = scalar_lea.vmem %s0, %s197
      %p199 = pneg %p37
      %p200 = pneg %p34
      %p201 = pneg %p58
      %p202 = pneg %p55
      %p203 = pneg %p79
      %p204 = pneg %p76
      %p205 = pneg %p100
      %p206 = pneg %p97
      %p207 = pneg %p121
      %p208 = pneg %p118
      %p209 = pneg %p147
      %p210 = pneg %p144
      %s211 = smul.u32 32, %s16
      %p212 = scmp.lt.s32.totalorder %s211, 63
      %s213 = scalar_select %p212, %s211, 63
      %s214 = smul.addr %s213, 8
      %s215 = scalar_lea.vmem %s5, %s214
      %s216 = smul.u32 32, %s16
      %p217 = scmp.lt.s32.totalorder %s216, 63
      %s218 = scalar_select %p217, %s216, 63
      %s219 = smul.addr %s218, 8
      %s220 = scalar_lea.vmem %s0, %s219
      %s221 = smul.u32 32, %s16
      %s222 = smul.u32 32, %s16
      %p223 = scmp.lt.s32.totalorder %s222, 63
      %s224 = scalar_select %p223, %s222, 63
      %s225 = smul.addr %s224, 8
      %s226 = scalar_lea.vmem %s5, %s225
      %s227 = smul.u32 32, %s16
      %v229 = vld [vmem:[%s220] sm:$0xff]
      %v230 = vld [vmem:[%s220 + $0x8] sm:$0xff]
      %v231 = vld [vmem:[%s220 + $0x10] sm:$0xff]
      %v232 = vld [vmem:[%s220 + $0x18] sm:$0xff]
      %v233 = vld [vmem:[%s220 + $0x20] sm:$0xff]
      %v234 = vld [vmem:[%s220 + $0x28] sm:$0xff]
      %v235 = vld [vmem:[%s220 + $0x30] sm:$0xff]
      %v236 = vld [vmem:[%s220 + $0x38] sm:$0xff]
      %v237 = vld [vmem:[%s220 + $0x40] sm:$0xff]
      %v238 = vld [vmem:[%s220 + $0x48] sm:$0xff]
      %v239 = vld [vmem:[%s220 + $0x50] sm:$0xff]
      %v240 = vld [vmem:[%s220 + $0x58] sm:$0xff]
      %v241 = vld [vmem:[%s220 + $0x60] sm:$0xff]
      %v242 = vld [vmem:[%s220 + $0x68] sm:$0xff]
      %v243 = vld [vmem:[%s220 + $0x70] sm:$0xff]
      %v244 = vld [vmem:[%s220 + $0x78] sm:$0xff]
      %v245 = vld [vmem:[%s220 + $0x80] sm:$0xff]
      %v246 = vld [vmem:[%s220 + $0x88] sm:$0xff]
      %v247 = vld [vmem:[%s220 + $0x90] sm:$0xff]
      %v248 = vld [vmem:[%s220 + $0x98] sm:$0xff]
      %v249 = vld [vmem:[%s220 + $0xa0] sm:$0xff]
      %v250 = vld [vmem:[%s220 + $0xa8] sm:$0xff]
      %v251 = vld [vmem:[%s220 + $0xb0] sm:$0xff]
      %v252 = vld [vmem:[%s220 + $0xb8] sm:$0xff]
      %v253 = vld [vmem:[%s220 + $0xc0] sm:$0xff]
      %v254 = vld [vmem:[%s220 + $0xc8] sm:$0xff]
      %v255 = vld [vmem:[%s220 + $0xd0] sm:$0xff]
      %v256 = vld [vmem:[%s220 + $0xd8] sm:$0xff]
      %v257 = vld [vmem:[%s220 + $0xe0] sm:$0xff]
      %v258 = vld [vmem:[%s220 + $0xe8] sm:$0xff]
      %v259 = vld [vmem:[%s220 + $0xf0] sm:$0xff]
      %v260 = vld [vmem:[%s220 + $0xf8] sm:$0xff]
      %v261 = vpack.c.bf16 %v230, %v229
      %v262 = vpack.c.bf16 %v232, %v231
      %v263 = vpack.c.bf16 %v234, %v233
      %v264 = vpack.c.bf16 %v236, %v235
      %v265 = vpack.c.bf16 %v238, %v237
      %v266 = vpack.c.bf16 %v240, %v239
      %v267 = vpack.c.bf16 %v242, %v241
      %v268 = vpack.c.bf16 %v244, %v243
      %v269 = vpack.c.bf16 %v246, %v245
      %v270 = vpack.c.bf16 %v248, %v247
      %v271 = vpack.c.bf16 %v250, %v249
      %v272 = vpack.c.bf16 %v252, %v251
      %v273 = vpack.c.bf16 %v254, %v253
      %v274 = vpack.c.bf16 %v256, %v255
      %v275 = vpack.c.bf16 %v258, %v257
      %v276 = vpack.c.bf16 %v260, %v259
      %v277 = vld [vmem:[%s1] sm:$0xff]
      %v278 = vld [vmem:[%s1 + $0x8] sm:$0xff]
      %v279 = vld [vmem:[%s1 + $0x10] sm:$0xff]
      %v280 = vld [vmem:[%s1 + $0x18] sm:$0xff]
      %v281 = vld [vmem:[%s2] sm:$0x3]
      %v283 = vlaneseq
      %v284 = vshrl.u32 %v283, 7
      %v285 = vsub.s32 0, %v284
      %v286 = vrot.slane %v281, %v285
      %v287 = vlaneseq
      %v288 = vshrl.u32 %v287, 7
      %v289 = vsub.s32 1, %v288
      %v290 = vrot.slane %v281, %v289
      %v297 = vunpack.c.l.b16 %v277
      %v298 = vunpack.c.h.b16 %v277
      %v299 = vunpack.c.l.b16 %v278
      %v300 = vunpack.c.h.b16 %v278
      %v301 = vunpack.c.l.b16 %v279
      %v302 = vunpack.c.h.b16 %v279
      %v303 = vunpack.c.l.b16 %v280
      %v304 = vunpack.c.h.b16 %v280
      %v305 = vpack.c.b16 %v299, %v297
      %v306 = vpack.c.b16 %v300, %v298
      %v307 = vpack.c.b16 %v303, %v301
      %v308 = vpack.c.b16 %v304, %v302
      %vm313 = vcmask 261120
      %v315 = vsel %vm313, %v261, 0
      %v318 = vsel %vm313, %v262, 0
      %v321 = vsel %vm313, %v263, 0
      %v324 = vsel %vm313, %v264, 0
      %v327 = vsel %vm313, %v265, 0
      %v330 = vsel %vm313, %v266, 0
      %v333 = vsel %vm313, %v267, 0
      %v336 = vsel %vm313, %v268, 0
      %v339 = vsel %vm313, %v269, 0
      %v342 = vsel %vm313, %v270, 0
      %v345 = vsel %vm313, %v271, 0
      %v348 = vsel %vm313, %v272, 0
      %v351 = vsel %vm313, %v273, 0
      %v354 = vsel %vm313, %v274, 0
      %v357 = vsel %vm313, %v275, 0
      %v360 = vsel %vm313, %v276, 0
      %362 = vmatprep.subr.bf16.mxu0 %v306
      %363 = vmatpush1.bf16.msra.mxu0 %v305
      %364 = vmatprep.subr.bf16.mxu0 %v308
      %365 = vmatpush1.bf16.msra.mxu0 %v307
      %366 = vmatprep.subr.bf16.mxu0 0
      %367 = vmatpush1.bf16.msra.mxu0 0
      %368 = vmatprep.subr.bf16.mxu0 0
      %369 = vmatpush1.bf16.msra.mxu0 0
      %370 = vmatprep.subr.bf16.mxu0 0
      %371 = vmatpush1.bf16.msra.mxu0 0
      %372 = vmatprep.subr.bf16.mxu0 0
      %373 = vmatpush1.bf16.msra.mxu0 0
      %374 = vmatprep.subr.bf16.mxu0 0
      %375 = vmatpush1.bf16.msra.mxu0 0
      %376 = vmatprep.subr.bf16.mxu0 0
      %377 = vmatpush1.bf16.msra.mxu0 0
      %378 = vmatprep.subr.bf16.mxu0 0
      %379 = vmatpush1.bf16.msra.mxu0 0
      %380 = vmatprep.subr.bf16.mxu0 0
      %381 = vmatpush1.bf16.msra.mxu0 0
      %382 = vmatprep.subr.bf16.mxu0 0
      %383 = vmatpush1.bf16.msra.mxu0 0
      %384 = vmatprep.subr.bf16.mxu0 0
      %385 = vmatpush1.bf16.msra.mxu0 0
      %386 = vmatprep.subr.bf16.mxu0 0
      %387 = vmatpush1.bf16.msra.mxu0 0
      %388 = vmatprep.subr.bf16.mxu0 0
      %389 = vmatpush1.bf16.msra.mxu0 0
      %390 = vmatprep.subr.bf16.mxu0 0
      %391 = vmatpush1.bf16.msra.mxu0 0
      %392 = vmatprep.subr.bf16.mxu0 0
      %393 = vmatpush1.bf16.msra.mxu0 0
      %394 = vmatprep.mubr.bf16.mxu0 0
      %395 = vmatmul.mubr.bf16.gmra.mrb[0].mxu0 %v315
      %v396 = vpop.f32.mrb[0].mxu0
      %v397 = vadd.f32 %v286, %v396
      %v398 = vpop.f32.mrb[0].mxu0
      %v399 = vadd.f32 %v290, %v398
      %v400 = vpop.f32.mrb[0].mxu0
      %v401 = vadd.f32 %v286, %v400
      %v402 = vpop.f32.mrb[0].mxu0
      %v403 = vadd.f32 %v290, %v402
      %404 = vmatprep.mubr.bf16.mxu0 0
      %405 = vmatmul.mubr.bf16.gmra.mrb[0].mxu0 %v318
      %v406 = vpop.f32.mrb[0].mxu0
      %v407 = vadd.f32 %v286, %v406
      %v408 = vpop.f32.mrb[0].mxu0
      %v409 = vadd.f32 %v290, %v408
      %v410 = vpop.f32.mrb[0].mxu0
      %v411 = vadd.f32 %v286, %v410
      %v412 = vpop.f32.mrb[0].mxu0
      %v413 = vadd.f32 %v290, %v412
      %414 = vmatprep.mubr.bf16.mxu0 0
      %415 = vmatmul.mubr.bf16.gmra.mrb[0].mxu0 %v321
      %v416 = vpop.f32.mrb[0].mxu0
      %v417 = vadd.f32 %v286, %v416
      %v418 = vpop.f32.mrb[0].mxu0
      %v419 = vadd.f32 %v290, %v418
      %v420 = vpop.f32.mrb[0].mxu0
      %v421 = vadd.f32 %v286, %v420
      %v422 = vpop.f32.mrb[0].mxu0
      %v423 = vadd.f32 %v290, %v422
      %424 = vmatprep.mubr.bf16.mxu0 0
      %425 = vmatmul.mubr.bf16.gmra.mrb[0].mxu0 %v324
      %v426 = vpop.f32.mrb[0].mxu0
      %v427 = vadd.f32 %v286, %v426
      %v428 = vpop.f32.mrb[0].mxu0
      %v429 = vadd.f32 %v290, %v428
      %v430 = vpop.f32.mrb[0].mxu0
      %v431 = vadd.f32 %v286, %v430
      %v432 = vpop.f32.mrb[0].mxu0
      %v433 = vadd.f32 %v290, %v432
      %434 = vmatprep.mubr.bf16.mxu0 0
      %435 = vmatmul.mubr.bf16.gmra.mrb[0].mxu0 %v327
      %v436 = vpop.f32.mrb[0].mxu0
      %v437 = vadd.f32 %v286, %v436
      %v438 = vpop.f32.mrb[0].mxu0
      %v439 = vadd.f32 %v290, %v438
      %v440 = vpop.f32.mrb[0].mxu0
      %v441 = vadd.f32 %v286, %v440
      %v442 = vpop.f32.mrb[0].mxu0
      %v443 = vadd.f32 %v290, %v442
      %444 = vmatprep.mubr.bf16.mxu0 0
      %445 = vmatmul.mubr.bf16.gmra.mrb[0].mxu0 %v330
      %v446 = vpop.f32.mrb[0].mxu0
      %v447 = vadd.f32 %v286, %v446
      %v448 = vpop.f32.mrb[0].mxu0
      %v449 = vadd.f32 %v290, %v448
      %v450 = vpop.f32.mrb[0].mxu0
      %v451 = vadd.f32 %v286, %v450
      %v452 = vpop.f32.mrb[0].mxu0
      %v453 = vadd.f32 %v290, %v452
      %454 = vmatprep.mubr.bf16.mxu0 0
      %455 = vmatmul.mubr.bf16.gmra.mrb[0].mxu0 %v333
      %v456 = vpop.f32.mrb[0].mxu0
      %v457 = vadd.f32 %v286, %v456
      %v458 = vpop.f32.mrb[0].mxu0
      %v459 = vadd.f32 %v290, %v458
      %v460 = vpop.f32.mrb[0].mxu0
      %v461 = vadd.f32 %v286, %v460
      %v462 = vpop.f32.mrb[0].mxu0
      %v463 = vadd.f32 %v290, %v462
      %464 = vmatprep.mubr.bf16.mxu0 0
      %465 = vmatmul.mubr.bf16.gmra.mrb[0].mxu0 %v336
      %v466 = vpop.f32.mrb[0].mxu0
      %v467 = vadd.f32 %v286, %v466
      %v468 = vpop.f32.mrb[0].mxu0
      %v469 = vadd.f32 %v290, %v468
      %v470 = vpop.f32.mrb[0].mxu0
      %v471 = vadd.f32 %v286, %v470
      %v472 = vpop.f32.mrb[0].mxu0
      %v473 = vadd.f32 %v290, %v472
      %474 = vmatprep.mubr.bf16.mxu0 0
      %475 = vmatmul.mubr.bf16.gmra.mrb[0].mxu0 %v339
      %v476 = vpop.f32.mrb[0].mxu0
      %v477 = vadd.f32 %v286, %v476
      %v478 = vpop.f32.mrb[0].mxu0
      %v479 = vadd.f32 %v290, %v478
      %v480 = vpop.f32.mrb[0].mxu0
      %v481 = vadd.f32 %v286, %v480
      %v482 = vpop.f32.mrb[0].mxu0
      %v483 = vadd.f32 %v290, %v482
      %484 = vmatprep.mubr.bf16.mxu0 0
      %485 = vmatmul.mubr.bf16.gmra.mrb[0].mxu0 %v342
      %v486 = vpop.f32.mrb[0].mxu0
      %v487 = vadd.f32 %v286, %v486
      %v488 = vpop.f32.mrb[0].mxu0
      %v489 = vadd.f32 %v290, %v488
      %v490 = vpop.f32.mrb[0].mxu0
      %v491 = vadd.f32 %v286, %v490
      %v492 = vpop.f32.mrb[0].mxu0
      %v493 = vadd.f32 %v290, %v492
      %494 = vmatprep.mubr.bf16.mxu0 0
      %495 = vmatmul.mubr.bf16.gmra.mrb[0].mxu0 %v345
      %v496 = vpop.f32.mrb[0].mxu0
      %v497 = vadd.f32 %v286, %v496
      %v498 = vpop.f32.mrb[0].mxu0
      %v499 = vadd.f32 %v290, %v498
      %v500 = vpop.f32.mrb[0].mxu0
      %v501 = vadd.f32 %v286, %v500
      %v502 = vpop.f32.mrb[0].mxu0
      %v503 = vadd.f32 %v290, %v502
      %504 = vmatprep.mubr.bf16.mxu0 0
      %505 = vmatmul.mubr.bf16.gmra.mrb[0].mxu0 %v348
      %v506 = vpop.f32.mrb[0].mxu0
      %v507 = vadd.f32 %v286, %v506
      %v508 = vpop.f32.mrb[0].mxu0
      %v509 = vadd.f32 %v290, %v508
      %v510 = vpop.f32.mrb[0].mxu0
      %v511 = vadd.f32 %v286, %v510
      %v512 = vpop.f32.mrb[0].mxu0
      %v513 = vadd.f32 %v290, %v512
      %514 = vmatprep.mubr.bf16.mxu0 0
      %515 = vmatmul.mubr.bf16.gmra.mrb[0].mxu0 %v351
      %v516 = vpop.f32.mrb[0].mxu0
      %v517 = vadd.f32 %v286, %v516
      %v518 = vpop.f32.mrb[0].mxu0
      %v519 = vadd.f32 %v290, %v518
      %v520 = vpop.f32.mrb[0].mxu0
      %v521 = vadd.f32 %v286, %v520
      %v522 = vpop.f32.mrb[0].mxu0
      %v523 = vadd.f32 %v290, %v522
      %524 = vmatprep.mubr.bf16.mxu0 0
      %525 = vmatmul.mubr.bf16.gmra.mrb[0].mxu0 %v354
      %v526 = vpop.f32.mrb[0].mxu0
      %v527 = vadd.f32 %v286, %v526
      %v528 = vpop.f32.mrb[0].mxu0
      %v529 = vadd.f32 %v290, %v528
      %v530 = vpop.f32.mrb[0].mxu0
      %v531 = vadd.f32 %v286, %v530
      %v532 = vpop.f32.mrb[0].mxu0
      %v533 = vadd.f32 %v290, %v532
      %534 = vmatprep.mubr.bf16.mxu0 0
      %535 = vmatmul.mubr.bf16.gmra.mrb[0].mxu0 %v357
      %v536 = vpop.f32.mrb[0].mxu0
      %v537 = vadd.f32 %v286, %v536
      %v538 = vpop.f32.mrb[0].mxu0
      %v539 = vadd.f32 %v290, %v538
      %v540 = vpop.f32.mrb[0].mxu0
      %v541 = vadd.f32 %v286, %v540
      %v542 = vpop.f32.mrb[0].mxu0
      %v543 = vadd.f32 %v290, %v542
      %544 = vmatprep.mubr.bf16.mxu0 0
      %545 = vmatmul.mubr.bf16.gmra.mrb[0].mxu0 %v360
      %v546 = vpop.f32.mrb[0].mxu0
      %v547 = vadd.f32 %v286, %v546
      %v548 = vpop.f32.mrb[0].mxu0
      %v549 = vadd.f32 %v290, %v548
      %v550 = vpop.f32.mrb[0].mxu0
      %v551 = vadd.f32 %v286, %v550
      %v552 = vpop.f32.mrb[0].mxu0
      %v553 = vadd.f32 %v290, %v552
      %554 = vdwg.mxu0
      %v555 = vtanh.pop %v397
      %v556 = vtanh.pop %v399
      %v557 = vtanh.pop %v401
      %v558 = vtanh.pop %v403
      %v559 = vtanh.pop %v407
      %v560 = vtanh.pop %v409
      %v561 = vtanh.pop %v411
      %v562 = vtanh.pop %v413
      %v563 = vtanh.pop %v417
      %v564 = vtanh.pop %v419
      %v565 = vtanh.pop %v421
      %v566 = vtanh.pop %v423
      %v567 = vtanh.pop %v427
      %v568 = vtanh.pop %v429
      %v569 = vtanh.pop %v431
      %v570 = vtanh.pop %v433
      %v571 = vtanh.pop %v437
      %v572 = vtanh.pop %v439
      %v573 = vtanh.pop %v441
      %v574 = vtanh.pop %v443
      %v575 = vtanh.pop %v447
      %v576 = vtanh.pop %v449
      %v577 = vtanh.pop %v451
      %v578 = vtanh.pop %v453
      %v579 = vtanh.pop %v457
      %v580 = vtanh.pop %v459
      %v581 = vtanh.pop %v461
      %v582 = vtanh.pop %v463
      %v583 = vtanh.pop %v467
      %v584 = vtanh.pop %v469
      %v585 = vtanh.pop %v471
      %v586 = vtanh.pop %v473
      %v587 = vtanh.pop %v477
      %v588 = vtanh.pop %v479
      %v589 = vtanh.pop %v481
      %v590 = vtanh.pop %v483
      %v591 = vtanh.pop %v487
      %v592 = vtanh.pop %v489
      %v593 = vtanh.pop %v491
      %v594 = vtanh.pop %v493
      %v595 = vtanh.pop %v497
      %v596 = vtanh.pop %v499
      %v597 = vtanh.pop %v501
      %v598 = vtanh.pop %v503
      %v599 = vtanh.pop %v507
      %v600 = vtanh.pop %v509
      %v601 = vtanh.pop %v511
      %v602 = vtanh.pop %v513
      %v603 = vtanh.pop %v517
      %v604 = vtanh.pop %v519
      %v605 = vtanh.pop %v521
      %v606 = vtanh.pop %v523
      %v607 = vtanh.pop %v527
      %v608 = vtanh.pop %v529
      %v609 = vtanh.pop %v531
      %v610 = vtanh.pop %v533
      %v611 = vtanh.pop %v537
      %v612 = vtanh.pop %v539
      %v613 = vtanh.pop %v541
      %v614 = vtanh.pop %v543
      %v615 = vtanh.pop %v547
      %v616 = vtanh.pop %v549
      %v617 = vtanh.pop %v551
      %v618 = vtanh.pop %v553
      %v619 = vpack.c.bf16 %v557, %v555
      %v620 = vpack.c.bf16 %v558, %v556
      %v621 = vpack.c.bf16 %v561, %v559
      %v622 = vpack.c.bf16 %v562, %v560
      %v623 = vpack.c.bf16 %v565, %v563
      %v624 = vpack.c.bf16 %v566, %v564
      %v625 = vpack.c.bf16 %v569, %v567
      %v626 = vpack.c.bf16 %v570, %v568
      %v627 = vpack.c.bf16 %v573, %v571
      %v628 = vpack.c.bf16 %v574, %v572
      %v629 = vpack.c.bf16 %v577, %v575
      %v630 = vpack.c.bf16 %v578, %v576
      %v631 = vpack.c.bf16 %v581, %v579
      %v632 = vpack.c.bf16 %v582, %v580
      %v633 = vpack.c.bf16 %v585, %v583
      %v634 = vpack.c.bf16 %v586, %v584
      %v635 = vpack.c.bf16 %v589, %v587
      %v636 = vpack.c.bf16 %v590, %v588
      %v637 = vpack.c.bf16 %v593, %v591
      %v638 = vpack.c.bf16 %v594, %v592
      %v639 = vpack.c.bf16 %v597, %v595
      %v640 = vpack.c.bf16 %v598, %v596
      %v641 = vpack.c.bf16 %v601, %v599
      %v642 = vpack.c.bf16 %v602, %v600
      %v643 = vpack.c.bf16 %v605, %v603
      %v644 = vpack.c.bf16 %v606, %v604
      %v645 = vpack.c.bf16 %v609, %v607
      %v646 = vpack.c.bf16 %v610, %v608
      %v647 = vpack.c.bf16 %v613, %v611
      %v648 = vpack.c.bf16 %v614, %v612
      %v649 = vpack.c.bf16 %v617, %v615
      %v650 = vpack.c.bf16 %v618, %v616
      %v651 = vld [vmem:[%s3] sm:$0xf]
      %v652 = vld [vmem:[%s3 + $0x4] sm:$0xf]
      %v653 = vld [vmem:[%s3 + $0x8] sm:$0xf]
      %v654 = vld [vmem:[%s3 + $0xc] sm:$0xf]
      %v655 = vld [vmem:[%s3 + $0x10] sm:$0xf]
      %v656 = vld [vmem:[%s3 + $0x14] sm:$0xf]
      %v657 = vld [vmem:[%s3 + $0x18] sm:$0xf]
      %v658 = vld [vmem:[%s3 + $0x1c] sm:$0xf]
      %v659 = vld [vmem:[%s3 + $0x20] sm:$0xf]
      %v660 = vld [vmem:[%s3 + $0x24] sm:$0xf]
      %v661 = vld [vmem:[%s3 + $0x28] sm:$0xf]
      %v662 = vld [vmem:[%s3 + $0x2c] sm:$0xf]
      %v663 = vld [vmem:[%s3 + $0x30] sm:$0xf]
      %v664 = vld [vmem:[%s3 + $0x34] sm:$0xf]
      %v665 = vld [vmem:[%s3 + $0x38] sm:$0xf]
      %v666 = vld [vmem:[%s3 + $0x3c] sm:$0xf]
      %v667 = vld [vmem:[%s3 + $0x40] sm:$0xf]
      %v668 = vld [vmem:[%s3 + $0x44] sm:$0xf]
      %v669 = vld [vmem:[%s3 + $0x48] sm:$0xf]
      %v670 = vld [vmem:[%s3 + $0x4c] sm:$0xf]
      %v671 = vld [vmem:[%s3 + $0x50] sm:$0xf]
      %v672 = vld [vmem:[%s3 + $0x54] sm:$0xf]
      %v673 = vld [vmem:[%s3 + $0x58] sm:$0xf]
      %v674 = vld [vmem:[%s3 + $0x5c] sm:$0xf]
      %v675 = vld [vmem:[%s3 + $0x60] sm:$0xf]
      %v676 = vld [vmem:[%s3 + $0x64] sm:$0xf]
      %v677 = vld [vmem:[%s3 + $0x68] sm:$0xf]
      %v678 = vld [vmem:[%s3 + $0x6c] sm:$0xf]
      %v679 = vld [vmem:[%s3 + $0x70] sm:$0xf]
      %v680 = vld [vmem:[%s3 + $0x74] sm:$0xf]
      %v681 = vld [vmem:[%s3 + $0x78] sm:$0xf]
      %v682 = vld [vmem:[%s3 + $0x7c] sm:$0xf]
      %v683 = vld [vmem:[%s4] sm:$0x1]
      %v685 = vlaneseq
      %v686 = vshrl.u32 %v685, 7
      %v687 = vsub.s32 0, %v686
      %v688 = vrot.slane %v683, %v687
      %v722 = vunpack.c.l.b16 %v651
      %v723 = vunpack.c.l.b16 %v652
      %v724 = vunpack.c.l.b16 %v653
      %v725 = vunpack.c.l.b16 %v654
      %v726 = vunpack.c.l.b16 %v655
      %v727 = vunpack.c.l.b16 %v656
      %v728 = vunpack.c.l.b16 %v657
      %v729 = vunpack.c.l.b16 %v658
      %v730 = vunpack.c.l.b16 %v659
      %v731 = vunpack.c.l.b16 %v660
      %v732 = vunpack.c.l.b16 %v661
      %v733 = vunpack.c.l.b16 %v662
      %v734 = vunpack.c.l.b16 %v663
      %v735 = vunpack.c.l.b16 %v664
      %v736 = vunpack.c.l.b16 %v665
      %v737 = vunpack.c.l.b16 %v666
      %v738 = vunpack.c.l.b16 %v667
      %v739 = vunpack.c.l.b16 %v668
      %v740 = vunpack.c.l.b16 %v669
      %v741 = vunpack.c.l.b16 %v670
      %v742 = vunpack.c.l.b16 %v671
      %v743 = vunpack.c.l.b16 %v672
      %v744 = vunpack.c.l.b16 %v673
      %v745 = vunpack.c.l.b16 %v674
      %v746 = vunpack.c.l.b16 %v675
      %v747 = vunpack.c.l.b16 %v676
      %v748 = vunpack.c.l.b16 %v677
      %v749 = vunpack.c.l.b16 %v678
      %v750 = vunpack.c.l.b16 %v679
      %v751 = vunpack.c.l.b16 %v680
      %v752 = vunpack.c.l.b16 %v681
      %v753 = vunpack.c.l.b16 %v682
      %v754 = vpack.c.b16 %v723, %v722
      %v755 = vpack.c.b16 %v725, %v724
      %v756 = vpack.c.b16 %v727, %v726
      %v757 = vpack.c.b16 %v729, %v728
      %v758 = vpack.c.b16 %v731, %v730
      %v759 = vpack.c.b16 %v733, %v732
      %v760 = vpack.c.b16 %v735, %v734
      %v761 = vpack.c.b16 %v737, %v736
      %v762 = vpack.c.b16 %v739, %v738
      %v763 = vpack.c.b16 %v741, %v740
      %v764 = vpack.c.b16 %v743, %v742
      %v765 = vpack.c.b16 %v745, %v744
      %v766 = vpack.c.b16 %v747, %v746
      %v767 = vpack.c.b16 %v749, %v748
      %v768 = vpack.c.b16 %v751, %v750
      %v769 = vpack.c.b16 %v753, %v752
      %786 = vmatprep.subr.bf16.mxu0 0
      %787 = vmatpush1.bf16.msra.mxu0 %v754
      %788 = vmatprep.subr.bf16.mxu0 0
      %789 = vmatpush1.bf16.msra.mxu0 %v755
      %790 = vmatprep.subr.bf16.mxu0 0
      %791 = vmatpush1.bf16.msra.mxu0 %v756
      %792 = vmatprep.subr.bf16.mxu0 0
      %793 = vmatpush1.bf16.msra.mxu0 %v757
      %794 = vmatprep.subr.bf16.mxu0 0
      %795 = vmatpush1.bf16.msra.mxu0 %v758
      %796 = vmatprep.subr.bf16.mxu0 0
      %797 = vmatpush1.bf16.msra.mxu0 %v759
      %798 = vmatprep.subr.bf16.mxu0 0
      %799 = vmatpush1.bf16.msra.mxu0 %v760
      %800 = vmatprep.subr.bf16.mxu0 0
      %801 = vmatpush1.bf16.msra.mxu0 %v761
      %802 = vmatprep.subr.bf16.mxu0 0
      %803 = vmatpush1.bf16.msra.mxu0 %v762
      %804 = vmatprep.subr.bf16.mxu0 0
      %805 = vmatpush1.bf16.msra.mxu0 %v763
      %806 = vmatprep.subr.bf16.mxu0 0
      %807 = vmatpush1.bf16.msra.mxu0 %v764
      %808 = vmatprep.subr.bf16.mxu0 0
      %809 = vmatpush1.bf16.msra.mxu0 %v765
      %810 = vmatprep.subr.bf16.mxu0 0
      %811 = vmatpush1.bf16.msra.mxu0 %v766
      %812 = vmatprep.subr.bf16.mxu0 0
      %813 = vmatpush1.bf16.msra.mxu0 %v767
      %814 = vmatprep.subr.bf16.mxu0 0
      %815 = vmatpush1.bf16.msra.mxu0 %v768
      %816 = vmatprep.subr.bf16.mxu0 0
      %817 = vmatpush1.bf16.msra.mxu0 %v769
      %818 = vmatprep.mubr.bf16.mxu0 %v620
      %819 = vmatmul.mubr.bf16.gmra.mrb[0].mxu0 %v619
      %v820 = vpop.f32.mrb[0].mxu0
      %v821 = vadd.f32 %v688, %v820
      %v822 = vpop.f32.mrb[0].mxu0
      %v823 = vpop.f32.mrb[0].mxu0
      %v824 = vadd.f32 %v688, %v823
      %v825 = vpop.f32.mrb[0].mxu0
      %826 = vmatprep.mubr.bf16.mxu0 %v622
      %827 = vmatmul.mubr.bf16.gmra.mrb[0].mxu0 %v621
      %v828 = vpop.f32.mrb[0].mxu0
      %v829 = vadd.f32 %v688, %v828
      %v830 = vpop.f32.mrb[0].mxu0
      %v831 = vpop.f32.mrb[0].mxu0
      %v832 = vadd.f32 %v688, %v831
      %v833 = vpop.f32.mrb[0].mxu0
      %834 = vmatprep.mubr.bf16.mxu0 %v624
      %835 = vmatmul.mubr.bf16.gmra.mrb[0].mxu0 %v623
      %v836 = vpop.f32.mrb[0].mxu0
      %v837 = vadd.f32 %v688, %v836
      %v838 = vpop.f32.mrb[0].mxu0
      %v839 = vpop.f32.mrb[0].mxu0
      %v840 = vadd.f32 %v688, %v839
      %v841 = vpop.f32.mrb[0].mxu0
      %842 = vmatprep.mubr.bf16.mxu0 %v626
      %843 = vmatmul.mubr.bf16.gmra.mrb[0].mxu0 %v625
      %v844 = vpop.f32.mrb[0].mxu0
      %v845 = vadd.f32 %v688, %v844
      %v846 = vpop.f32.mrb[0].mxu0
      %v847 = vpop.f32.mrb[0].mxu0
      %v848 = vadd.f32 %v688, %v847
      %v849 = vpop.f32.mrb[0].mxu0
      %850 = vmatprep.mubr.bf16.mxu0 %v628
      %851 = vmatmul.mubr.bf16.gmra.mrb[0].mxu0 %v627
      %v852 = vpop.f32.mrb[0].mxu0
      %v853 = vadd.f32 %v688, %v852
      %v854 = vpop.f32.mrb[0].mxu0
      %v855 = vpop.f32.mrb[0].mxu0
      %v856 = vadd.f32 %v688, %v855
      %v857 = vpop.f32.mrb[0].mxu0
      %858 = vmatprep.mubr.bf16.mxu0 %v630
      %859 = vmatmul.mubr.bf16.gmra.mrb[0].mxu0 %v629
      %v860 = vpop.f32.mrb[0].mxu0
      %v861 = vadd.f32 %v688, %v860
      %v862 = vpop.f32.mrb[0].mxu0
      %v863 = vpop.f32.mrb[0].mxu0
      %v864 = vadd.f32 %v688, %v863
      %v865 = vpop.f32.mrb[0].mxu0
      %866 = vmatprep.mubr.bf16.mxu0 %v632
      %867 = vmatmul.mubr.bf16.gmra.mrb[0].mxu0 %v631
      %v868 = vpop.f32.mrb[0].mxu0
      %v869 = vadd.f32 %v688, %v868
      %v870 = vpop.f32.mrb[0].mxu0
      %v871 = vpop.f32.mrb[0].mxu0
      %v872 = vadd.f32 %v688, %v871
      %v873 = vpop.f32.mrb[0].mxu0
      %874 = vmatprep.mubr.bf16.mxu0 %v634
      %875 = vmatmul.mubr.bf16.gmra.mrb[0].mxu0 %v633
      %v876 = vpop.f32.mrb[0].mxu0
      %v877 = vadd.f32 %v688, %v876
      %v878 = vpop.f32.mrb[0].mxu0
      %v879 = vpop.f32.mrb[0].mxu0
      %v880 = vadd.f32 %v688, %v879
      %v881 = vpop.f32.mrb[0].mxu0
      %882 = vmatprep.mubr.bf16.mxu0 %v636
      %883 = vmatmul.mubr.bf16.gmra.mrb[0].mxu0 %v635
      %v884 = vpop.f32.mrb[0].mxu0
      %v885 = vadd.f32 %v688, %v884
      %v886 = vpop.f32.mrb[0].mxu0
      %v887 = vpop.f32.mrb[0].mxu0
      %v888 = vadd.f32 %v688, %v887
      %v889 = vpop.f32.mrb[0].mxu0
      %890 = vmatprep.mubr.bf16.mxu0 %v638
      %891 = vmatmul.mubr.bf16.gmra.mrb[0].mxu0 %v637
      %v892 = vpop.f32.mrb[0].mxu0
      %v893 = vadd.f32 %v688, %v892
      %v894 = vpop.f32.mrb[0].mxu0
      %v895 = vpop.f32.mrb[0].mxu0
      %v896 = vadd.f32 %v688, %v895
      %v897 = vpop.f32.mrb[0].mxu0
      %898 = vmatprep.mubr.bf16.mxu0 %v640
      %899 = vmatmul.mubr.bf16.gmra.mrb[0].mxu0 %v639
      %v900 = vpop.f32.mrb[0].mxu0
      %v901 = vadd.f32 %v688, %v900
      %v902 = vpop.f32.mrb[0].mxu0
      %v903 = vpop.f32.mrb[0].mxu0
      %v904 = vadd.f32 %v688, %v903
      %v905 = vpop.f32.mrb[0].mxu0
      %906 = vmatprep.mubr.bf16.mxu0 %v642
      %907 = vmatmul.mubr.bf16.gmra.mrb[0].mxu0 %v641
      %v908 = vpop.f32.mrb[0].mxu0
      %v909 = vadd.f32 %v688, %v908
      %v910 = vpop.f32.mrb[0].mxu0
      %v911 = vpop.f32.mrb[0].mxu0
      %v912 = vadd.f32 %v688, %v911
      %v913 = vpop.f32.mrb[0].mxu0
      %914 = vmatprep.mubr.bf16.mxu0 %v644
      %915 = vmatmul.mubr.bf16.gmra.mrb[0].mxu0 %v643
      %v916 = vpop.f32.mrb[0].mxu0
      %v917 = vadd.f32 %v688, %v916
      %v918 = vpop.f32.mrb[0].mxu0
      %v919 = vpop.f32.mrb[0].mxu0
      %v920 = vadd.f32 %v688, %v919
      %v921 = vpop.f32.mrb[0].mxu0
      %922 = vmatprep.mubr.bf16.mxu0 %v646
      %923 = vmatmul.mubr.bf16.gmra.mrb[0].mxu0 %v645
      %v924 = vpop.f32.mrb[0].mxu0
      %v925 = vadd.f32 %v688, %v924
      %v926 = vpop.f32.mrb[0].mxu0
      %v927 = vpop.f32.mrb[0].mxu0
      %v928 = vadd.f32 %v688, %v927
      %v929 = vpop.f32.mrb[0].mxu0
      %930 = vmatprep.mubr.bf16.mxu0 %v648
      %931 = vmatmul.mubr.bf16.gmra.mrb[0].mxu0 %v647
      %v932 = vpop.f32.mrb[0].mxu0
      %v933 = vadd.f32 %v688, %v932
      %v934 = vpop.f32.mrb[0].mxu0
      %v935 = vpop.f32.mrb[0].mxu0
      %v936 = vadd.f32 %v688, %v935
      %v937 = vpop.f32.mrb[0].mxu0
      %938 = vmatprep.mubr.bf16.mxu0 %v650
      %939 = vmatmul.mubr.bf16.gmra.mrb[0].mxu0 %v649
      %v940 = vpop.f32.mrb[0].mxu0
      %v941 = vadd.f32 %v688, %v940
      %v942 = vpop.f32.mrb[0].mxu0
      %v943 = vpop.f32.mrb[0].mxu0
      %v944 = vadd.f32 %v688, %v943
      %v945 = vpop.f32.mrb[0].mxu0
      %946 = vdwg.mxu0
      %947 = vmax.xlane.f32.xlu0 %v821
      %v948 = vpop.xlane.xlu0 %947
      %949 = vmax.xlane.f32.xlu0 %v824
      %v950 = vpop.xlane.xlu0 %949
      %951 = vmax.xlane.f32.xlu0 %v829
      %v952 = vpop.xlane.xlu0 %951
      %953 = vmax.xlane.f32.xlu0 %v832
      %v954 = vpop.xlane.xlu0 %953
      %955 = vmax.xlane.f32.xlu0 %v837
      %v956 = vpop.xlane.xlu0 %955
      %957 = vmax.xlane.f32.xlu0 %v840
      %v958 = vpop.xlane.xlu0 %957
      %959 = vmax.xlane.f32.xlu0 %v845
      %v960 = vpop.xlane.xlu0 %959
      %961 = vmax.xlane.f32.xlu0 %v848
      %v962 = vpop.xlane.xlu0 %961
      %963 = vmax.xlane.f32.xlu0 %v853
      %v964 = vpop.xlane.xlu0 %963
      %965 = vmax.xlane.f32.xlu0 %v856
      %v966 = vpop.xlane.xlu0 %965
      %967 = vmax.xlane.f32.xlu0 %v861
      %v968 = vpop.xlane.xlu0 %967
      %969 = vmax.xlane.f32.xlu0 %v864
      %v970 = vpop.xlane.xlu0 %969
      %971 = vmax.xlane.f32.xlu0 %v869
      %v972 = vpop.xlane.xlu0 %971
      %973 = vmax.xlane.f32.xlu0 %v872
      %v974 = vpop.xlane.xlu0 %973
      %975 = vmax.xlane.f32.xlu0 %v877
      %v976 = vpop.xlane.xlu0 %975
      %977 = vmax.xlane.f32.xlu0 %v880
      %v978 = vpop.xlane.xlu0 %977
      %979 = vmax.xlane.f32.xlu0 %v885
      %v980 = vpop.xlane.xlu0 %979
      %981 = vmax.xlane.f32.xlu0 %v888
      %v982 = vpop.xlane.xlu0 %981
      %983 = vmax.xlane.f32.xlu0 %v893
      %v984 = vpop.xlane.xlu0 %983
      %985 = vmax.xlane.f32.xlu0 %v896
      %v986 = vpop.xlane.xlu0 %985
      %987 = vmax.xlane.f32.xlu0 %v901
      %v988 = vpop.xlane.xlu0 %987
      %989 = vmax.xlane.f32.xlu0 %v904
      %v990 = vpop.xlane.xlu0 %989
      %991 = vmax.xlane.f32.xlu0 %v909
      %v992 = vpop.xlane.xlu0 %991
      %993 = vmax.xlane.f32.xlu0 %v912
      %v994 = vpop.xlane.xlu0 %993
      %995 = vmax.xlane.f32.xlu0 %v917
      %v996 = vpop.xlane.xlu0 %995
      %997 = vmax.xlane.f32.xlu0 %v920
      %v998 = vpop.xlane.xlu0 %997
      %999 = vmax.xlane.f32.xlu0 %v925
      %v1000 = vpop.xlane.xlu0 %999
      %1001 = vmax.xlane.f32.xlu0 %v928
      %v1002 = vpop.xlane.xlu0 %1001
      %1003 = vmax.xlane.f32.xlu0 %v933
      %v1004 = vpop.xlane.xlu0 %1003
      %1005 = vmax.xlane.f32.xlu0 %v936
      %v1006 = vpop.xlane.xlu0 %1005
      %1007 = vmax.xlane.f32.xlu0 %v941
      %v1008 = vpop.xlane.xlu0 %1007
      %1009 = vmax.xlane.f32.xlu0 %v944
      %v1010 = vpop.xlane.xlu0 %1009
      %v1011 = vsub.f32 %v821, %v948
      %v1012 = vsub.f32 %v824, %v950
      %v1013 = vsub.f32 %v829, %v952
      %v1014 = vsub.f32 %v832, %v954
      %v1015 = vsub.f32 %v837, %v956
      %v1016 = vsub.f32 %v840, %v958
      %v1017 = vsub.f32 %v845, %v960
      %v1018 = vsub.f32 %v848, %v962
      %v1019 = vsub.f32 %v853, %v964
      %v1020 = vsub.f32 %v856, %v966
      %v1021 = vsub.f32 %v861, %v968
      %v1022 = vsub.f32 %v864, %v970
      %v1023 = vsub.f32 %v869, %v972
      %v1024 = vsub.f32 %v872, %v974
      %v1025 = vsub.f32 %v877, %v976
      %v1026 = vsub.f32 %v880, %v978
      %v1027 = vsub.f32 %v885, %v980
      %v1028 = vsub.f32 %v888, %v982
      %v1029 = vsub.f32 %v893, %v984
      %v1030 = vsub.f32 %v896, %v986
      %v1031 = vsub.f32 %v901, %v988
      %v1032 = vsub.f32 %v904, %v990
      %v1033 = vsub.f32 %v909, %v992
      %v1034 = vsub.f32 %v912, %v994
      %v1035 = vsub.f32 %v917, %v996
      %v1036 = vsub.f32 %v920, %v998
      %v1037 = vsub.f32 %v925, %v1000
      %v1038 = vsub.f32 %v928, %v1002
      %v1039 = vsub.f32 %v933, %v1004
      %v1040 = vsub.f32 %v936, %v1006
      %v1041 = vsub.f32 %v941, %v1008
      %v1042 = vsub.f32 %v944, %v1010
      %v1043 = vmul.f32 %v1011, 1.442695
      %v1044 = vpow.pop %v1043
      %v1045 = vmul.f32 %v1012, 1.442695
      %v1046 = vpow.pop %v1045
      %v1047 = vmul.f32 %v1013, 1.442695
      %v1048 = vpow.pop %v1047
      %v1049 = vmul.f32 %v1014, 1.442695
      %v1050 = vpow.pop %v1049
      %v1051 = vmul.f32 %v1015, 1.442695
      %v1052 = vpow.pop %v1051
      %v1053 = vmul.f32 %v1016, 1.442695
      %v1054 = vpow.pop %v1053
      %v1055 = vmul.f32 %v1017, 1.442695
      %v1056 = vpow.pop %v1055
      %v1057 = vmul.f32 %v1018, 1.442695
      %v1058 = vpow.pop %v1057
      %v1059 = vmul.f32 %v1019, 1.442695
      %v1060 = vpow.pop %v1059
      %v1061 = vmul.f32 %v1020, 1.442695
      %v1062 = vpow.pop %v1061
      %v1063 = vmul.f32 %v1021, 1.442695
      %v1064 = vpow.pop %v1063
      %v1065 = vmul.f32 %v1022, 1.442695
      %v1066 = vpow.pop %v1065
      %v1067 = vmul.f32 %v1023, 1.442695
      %v1068 = vpow.pop %v1067
      %v1069 = vmul.f32 %v1024, 1.442695
      %v1070 = vpow.pop %v1069
      %v1071 = vmul.f32 %v1025, 1.442695
      %v1072 = vpow.pop %v1071
      %v1073 = vmul.f32 %v1026, 1.442695
      %v1074 = vpow.pop %v1073
      %v1075 = vmul.f32 %v1027, 1.442695
      %v1076 = vpow.pop %v1075
      %v1077 = vmul.f32 %v1028, 1.442695
      %v1078 = vpow.pop %v1077
      %v1079 = vmul.f32 %v1029, 1.442695
      %v1080 = vpow.pop %v1079
      %v1081 = vmul.f32 %v1030, 1.442695
      %v1082 = vpow.pop %v1081
      %v1083 = vmul.f32 %v1031, 1.442695
      %v1084 = vpow.pop %v1083
      %v1085 = vmul.f32 %v1032, 1.442695
      %v1086 = vpow.pop %v1085
      %v1087 = vmul.f32 %v1033, 1.442695
      %v1088 = vpow.pop %v1087
      %v1089 = vmul.f32 %v1034, 1.442695
      %v1090 = vpow.pop %v1089
      %v1091 = vmul.f32 %v1035, 1.442695
      %v1092 = vpow.pop %v1091
      %v1093 = vmul.f32 %v1036, 1.442695
      %v1094 = vpow.pop %v1093
      %v1095 = vmul.f32 %v1037, 1.442695
      %v1096 = vpow.pop %v1095
      %v1097 = vmul.f32 %v1038, 1.442695
      %v1098 = vpow.pop %v1097
      %v1099 = vmul.f32 %v1039, 1.442695
      %v1100 = vpow.pop %v1099
      %v1101 = vmul.f32 %v1040, 1.442695
      %v1102 = vpow.pop %v1101
      %v1103 = vmul.f32 %v1041, 1.442695
      %v1104 = vpow.pop %v1103
      %v1105 = vmul.f32 %v1042, 1.442695
      %v1106 = vpow.pop %v1105
      %1107 = vadd.xlane.f32.xlu0 %v1044
      %v1108 = vpop.xlane.xlu0 %1107
      %1109 = vadd.xlane.f32.xlu0 %v1046
      %v1110 = vpop.xlane.xlu0 %1109
      %1111 = vadd.xlane.f32.xlu0 %v1048
      %v1112 = vpop.xlane.xlu0 %1111
      %1113 = vadd.xlane.f32.xlu0 %v1050
      %v1114 = vpop.xlane.xlu0 %1113
      %1115 = vadd.xlane.f32.xlu0 %v1052
      %v1116 = vpop.xlane.xlu0 %1115
      %1117 = vadd.xlane.f32.xlu0 %v1054
      %v1118 = vpop.xlane.xlu0 %1117
      %1119 = vadd.xlane.f32.xlu0 %v1056
      %v1120 = vpop.xlane.xlu0 %1119
      %1121 = vadd.xlane.f32.xlu0 %v1058
      %v1122 = vpop.xlane.xlu0 %1121
      %1123 = vadd.xlane.f32.xlu0 %v1060
      %v1124 = vpop.xlane.xlu0 %1123
      %1125 = vadd.xlane.f32.xlu0 %v1062
      %v1126 = vpop.xlane.xlu0 %1125
      %1127 = vadd.xlane.f32.xlu0 %v1064
      %v1128 = vpop.xlane.xlu0 %1127
      %1129 = vadd.xlane.f32.xlu0 %v1066
      %v1130 = vpop.xlane.xlu0 %1129
      %1131 = vadd.xlane.f32.xlu0 %v1068
      %v1132 = vpop.xlane.xlu0 %1131
      %1133 = vadd.xlane.f32.xlu0 %v1070
      %v1134 = vpop.xlane.xlu0 %1133
      %1135 = vadd.xlane.f32.xlu0 %v1072
      %v1136 = vpop.xlane.xlu0 %1135
      %1137 = vadd.xlane.f32.xlu0 %v1074
      %v1138 = vpop.xlane.xlu0 %1137
      %1139 = vadd.xlane.f32.xlu0 %v1076
      %v1140 = vpop.xlane.xlu0 %1139
      %1141 = vadd.xlane.f32.xlu0 %v1078
      %v1142 = vpop.xlane.xlu0 %1141
      %1143 = vadd.xlane.f32.xlu0 %v1080
      %v1144 = vpop.xlane.xlu0 %1143
      %1145 = vadd.xlane.f32.xlu0 %v1082
      %v1146 = vpop.xlane.xlu0 %1145
      %1147 = vadd.xlane.f32.xlu0 %v1084
      %v1148 = vpop.xlane.xlu0 %1147
      %1149 = vadd.xlane.f32.xlu0 %v1086
      %v1150 = vpop.xlane.xlu0 %1149
      %1151 = vadd.xlane.f32.xlu0 %v1088
      %v1152 = vpop.xlane.xlu0 %1151
      %1153 = vadd.xlane.f32.xlu0 %v1090
      %v1154 = vpop.xlane.xlu0 %1153
      %1155 = vadd.xlane.f32.xlu0 %v1092
      %v1156 = vpop.xlane.xlu0 %1155
      %1157 = vadd.xlane.f32.xlu0 %v1094
      %v1158 = vpop.xlane.xlu0 %1157
      %1159 = vadd.xlane.f32.xlu0 %v1096
      %v1160 = vpop.xlane.xlu0 %1159
      %1161 = vadd.xlane.f32.xlu0 %v1098
      %v1162 = vpop.xlane.xlu0 %1161
      %1163 = vadd.xlane.f32.xlu0 %v1100
      %v1164 = vpop.xlane.xlu0 %1163
      %1165 = vadd.xlane.f32.xlu0 %v1102
      %v1166 = vpop.xlane.xlu0 %1165
      %1167 = vadd.xlane.f32.xlu0 %v1104
      %v1168 = vpop.xlane.xlu0 %1167
      %1169 = vadd.xlane.f32.xlu0 %v1106
      %v1170 = vpop.xlane.xlu0 %1169
      %v1171 = vrcp.pop %v1108
      %v1172 = vrcp.pop %v1110
      %v1173 = vrcp.pop %v1112
      %v1174 = vrcp.pop %v1114
      %v1175 = vrcp.pop %v1116
      %v1176 = vrcp.pop %v1118
      %v1177 = vrcp.pop %v1120
      %v1178 = vrcp.pop %v1122
      %v1179 = vrcp.pop %v1124
      %v1180 = vrcp.pop %v1126
      %v1181 = vrcp.pop %v1128
      %v1182 = vrcp.pop %v1130
      %v1183 = vrcp.pop %v1132
      %v1184 = vrcp.pop %v1134
      %v1185 = vrcp.pop %v1136
      %v1186 = vrcp.pop %v1138
      %v1187 = vrcp.pop %v1140
      %v1188 = vrcp.pop %v1142
      %v1189 = vrcp.pop %v1144
      %v1190 = vrcp.pop %v1146
      %v1191 = vrcp.pop %v1148
      %v1192 = vrcp.pop %v1150
      %v1193 = vrcp.pop %v1152
      %v1194 = vrcp.pop %v1154
      %v1195 = vrcp.pop %v1156
      %v1196 = vrcp.pop %v1158
      %v1197 = vrcp.pop %v1160
      %v1198 = vrcp.pop %v1162
      %v1199 = vrcp.pop %v1164
      %v1200 = vrcp.pop %v1166
      %v1201 = vrcp.pop %v1168
      %v1202 = vrcp.pop %v1170
      %v1203 = vmul.f32 %v1044, %v1171
      %v1204 = vmul.f32 %v1046, %v1172
      %v1205 = vmul.f32 %v1048, %v1173
      %v1206 = vmul.f32 %v1050, %v1174
      %v1207 = vmul.f32 %v1052, %v1175
      %v1208 = vmul.f32 %v1054, %v1176
      %v1209 = vmul.f32 %v1056, %v1177
      %v1210 = vmul.f32 %v1058, %v1178
      %v1211 = vmul.f32 %v1060, %v1179
      %v1212 = vmul.f32 %v1062, %v1180
      %v1213 = vmul.f32 %v1064, %v1181
      %v1214 = vmul.f32 %v1066, %v1182
      %v1215 = vmul.f32 %v1068, %v1183
      %v1216 = vmul.f32 %v1070, %v1184
      %v1217 = vmul.f32 %v1072, %v1185
      %v1218 = vmul.f32 %v1074, %v1186
      %v1219 = vmul.f32 %v1076, %v1187
      %v1220 = vmul.f32 %v1078, %v1188
      %v1221 = vmul.f32 %v1080, %v1189
      %v1222 = vmul.f32 %v1082, %v1190
      %v1223 = vmul.f32 %v1084, %v1191
      %v1224 = vmul.f32 %v1086, %v1192
      %v1225 = vmul.f32 %v1088, %v1193
      %v1226 = vmul.f32 %v1090, %v1194
      %v1227 = vmul.f32 %v1092, %v1195
      %v1228 = vmul.f32 %v1094, %v1196
      %v1229 = vmul.f32 %v1096, %v1197
      %v1230 = vmul.f32 %v1098, %v1198
      %v1231 = vmul.f32 %v1100, %v1199
      %v1232 = vmul.f32 %v1102, %v1200
      %v1233 = vmul.f32 %v1104, %v1201
      %v1234 = vmul.f32 %v1106, %v1202
      %vm1235 = vcmask 64512
      %1236 = vst.msk [vmem:[%s226] sm:$0xff] %vm1235, %v1203
      %1237 = vst.msk [vmem:[%s226 + $0x8] sm:$0xff] %vm1235, %v1204
      %1238 = vst.msk [vmem:[%s226 + $0x10] sm:$0xff] %vm1235, %v1205
      %1239 = vst.msk [vmem:[%s226 + $0x18] sm:$0xff] %vm1235, %v1206
      %1240 = vst.msk [vmem:[%s226 + $0x20] sm:$0xff] %vm1235, %v1207
      %1241 = vst.msk [vmem:[%s226 + $0x28] sm:$0xff] %vm1235, %v1208
      %1242 = vst.msk [vmem:[%s226 + $0x30] sm:$0xff] %vm1235, %v1209
      %1243 = vst.msk [vmem:[%s226 + $0x38] sm:$0xff] %vm1235, %v1210
      %1244 = vst.msk [vmem:[%s226 + $0x40] sm:$0xff] %vm1235, %v1211
      %1245 = vst.msk [vmem:[%s226 + $0x48] sm:$0xff] %vm1235, %v1212
      %1246 = vst.msk [vmem:[%s226 + $0x50] sm:$0xff] %vm1235, %v1213
      %1247 = vst.msk [vmem:[%s226 + $0x58] sm:$0xff] %vm1235, %v1214
      %1248 = vst.msk [vmem:[%s226 + $0x60] sm:$0xff] %vm1235, %v1215
      %1249 = vst.msk [vmem:[%s226 + $0x68] sm:$0xff] %vm1235, %v1216
      %1250 = vst.msk [vmem:[%s226 + $0x70] sm:$0xff] %vm1235, %v1217
      %1251 = vst.msk [vmem:[%s226 + $0x78] sm:$0xff] %vm1235, %v1218
      %1252 = vst.msk [vmem:[%s226 + $0x80] sm:$0xff] %vm1235, %v1219
      %1253 = vst.msk [vmem:[%s226 + $0x88] sm:$0xff] %vm1235, %v1220
      %1254 = vst.msk [vmem:[%s226 + $0x90] sm:$0xff] %vm1235, %v1221
      %1255 = vst.msk [vmem:[%s226 + $0x98] sm:$0xff] %vm1235, %v1222
      %1256 = vst.msk [vmem:[%s226 + $0xa0] sm:$0xff] %vm1235, %v1223
      %1257 = vst.msk [vmem:[%s226 + $0xa8] sm:$0xff] %vm1235, %v1224
      %1258 = vst.msk [vmem:[%s226 + $0xb0] sm:$0xff] %vm1235, %v1225
      %1259 = vst.msk [vmem:[%s226 + $0xb8] sm:$0xff] %vm1235, %v1226
      %1260 = vst.msk [vmem:[%s226 + $0xc0] sm:$0xff] %vm1235, %v1227
      %1261 = vst.msk [vmem:[%s226 + $0xc8] sm:$0xff] %vm1235, %v1228
      %1262 = vst.msk [vmem:[%s226 + $0xd0] sm:$0xff] %vm1235, %v1229
      %1263 = vst.msk [vmem:[%s226 + $0xd8] sm:$0xff] %vm1235, %v1230
      %1264 = vst.msk [vmem:[%s226 + $0xe0] sm:$0xff] %vm1235, %v1231
      %1265 = vst.msk [vmem:[%s226 + $0xe8] sm:$0xff] %vm1235, %v1232
      %1266 = vst.msk [vmem:[%s226 + $0xf0] sm:$0xff] %vm1235, %v1233
      %1267 = vst.msk [vmem:[%s226 + $0xf8] sm:$0xff] %vm1235, %v1234
      %s1268 = smul.u32 32, %s16
      %p1269 = scmp.lt.s32.totalorder %s1268, 63
      %s1270 = scalar_select %p1269, %s1268, 63
      %s1271 = smul.addr %s1270, 8
      %s1272 = scalar_lea.vmem %s5, %s1271
      // Predicated region
      $region41: #{tpu_custom_call.1} parent=39 // pred_check
        %p1273 = pneg %p144
      $region42: #{tpu_custom_call.1} parent=39 // pred_check_branch
        %1275 = sbr.rel (%p1273) target = $region44
      $region43: #{tpu_custom_call.1} parent=39 // pred_region
        %s1276 = smul.u32 32, %s16
      $region44: #{tpu_custom_call.1} parent=39 // pred_fallthru
        _
    $region40: #{tpu_custom_call.1} parent=5 // pred_fallthru
      _
    %p1277 = scmp.le.s32.totalorder 2, %s11
    // Predicated region
    $region45: #{tpu_custom_call.1} parent=5 // pred_check
      %p1278 = pneg %p1277
    $region46: #{tpu_custom_call.1} parent=5 // pred_check_branch
      %1280 = sbr.rel (%p1278) target = $region48
    $region47: #{tpu_custom_call.1} parent=5 // pred_region
      %s1281 = ssub.s32 %s11, 2
      // Predicated region
      $region49: #{tpu_custom_call.1} parent=47 // pred_check
        %p1282 = pneg %p150
      $region50: #{tpu_custom_call.1} parent=47 // pred_check_branch
        %1284 = sbr.rel (%p1282) target = $region52
      $region51: #{tpu_custom_call.1} parent=47 // pred_region
        %s1285 = smul.u32 32, %s17
        %p1286 = scmp.lt.s32.totalorder %s1285, 63
        %s1287 = scalar_select %p1286, %s1285, 63
        %s1288 = smul.addr %s1287, 8
        %s1289 = scalar_lea.vmem %s5, %s1288
      $region52: #{tpu_custom_call.1} parent=47 // pred_fallthru
        _
    $region48: #{tpu_custom_call.1} parent=5 // pred_fallthru
      _
  $region6: #{tpu_custom_call.1} parent=0 // loop_footer
    %s15 = sadd.s32 1, %s11
  $region7: #{tpu_custom_call.1} parent=0 // loop_footer_branch
    %10 = sbr.rel target = $region3
  $region8: #{tpu_custom_call.1} parent=0 // loop_exit
    _

</llo_original>
